<compile_context>
chip_gen: v7x
topology: tpu7x:2x2x1
jax: 0.10.0
libtpu: 0.0.40
codegen_flags: <defaults>
</compile_context>

<pallas_src>
import functools
import math

import jax
import jax.numpy as jnp
from jax.experimental import pallas as pl
from jax.experimental.pallas import tpu as pltpu


# ----------------------------------------------------------------------------- kernel
def _segment_stat(v, seg_masks, inv_d):
    """Per-row mean of `v` over each D-lane segment, broadcast back across the segment."""
    out = jnp.zeros_like(v)
    for mf in seg_masks:
        out = out + mf * (jnp.sum(v * mf, axis=-1, keepdims=True) * inv_d)
    return out


def video_embedding_kernel(x_ref, w_ref, p_ref, pe_ref, o_ref, *, d_model):
    # x_ref : (TTp, P*F)  -- P consecutive (b, t) rows packed side by side along lanes
    # w_ref : (P*F, 128)  -- block-diagonal copy of the (F, D) projection weight
    # p_ref : (3, 128)    -- rows = [bias, gamma, beta], each tiled P times along lanes
    # pe_ref: (TTp, 128)  -- packed positional-embedding slab for one tile (resident)
    # o_ref : (TTp, 128)  -- packed output (contiguous view of (B, T, D))
    h = jnp.dot(x_ref[...], w_ref[...], preferred_element_type=jnp.float32)
    params = p_ref[...]
    h = h + params[0:1, :]                                      # packed bias

    # GELU (exact erf -- matches nn.GELU() default), full 128 lanes live.
    h = 0.5 * h * (1.0 + jax.lax.erf(h * (1.0 / math.sqrt(2.0))))

    # LayerNorm over each d_model-lane segment (eps=1e-12), exact f32 masked reductions.
    nlanes = h.shape[-1]
    lane = jax.lax.broadcasted_iota(jnp.int32, (1, nlanes), 1)
    seg_masks = [
        jnp.where((lane >= s * d_model) & (lane < (s + 1) * d_model), 1.0, 0.0)
        for s in range(nlanes // d_model)
    ]
    inv_d = 1.0 / d_model
    mean = _segment_stat(h, seg_masks, inv_d)
    centered = h - mean
    var = _segment_stat(centered * centered, seg_masks, inv_d)
    h = centered * jax.lax.rsqrt(var + 1e-12) * params[1:2, :] + params[2:3, :]

    # Positional embedding add; dropout is identity in eval mode.
    o_ref[...] = (h + pe_ref[...]).astype(o_ref.dtype)


# ----------------------------------------------------------------------------- wrapper
def video_embedding(x, w, b, gamma, beta, pe, *, row_budget=8192):
    """x: (B, T, F).  w: (F, D).  b/gamma/beta: (D,).  pe: (T, D).  Returns (B, T, D) f32."""
    B, T, F = x.shape
    D = w.shape[1]
    assert pe.shape == (T, D)

    # Lane-packing factor: P original rows share one 128-lane vector row.
    assert 128 % D == 0, "lane-dense packing requires d_model to divide 128"
    P = 128 // D
    assert T % P == 0, "lane-dense packing requires seq_len % (128 // d_model) == 0"
    Tp = T // P                          # packed rows per sequence
    Np = (B * T) // P                    # total packed rows
    PF, PD = P * F, P * D                # PD == 128

    # Tile = k whole sequences.  Largest k that (a) fits the row budget, (b) divides B
    # (no partial tiles), (c) keeps the packed sublane dim a multiple of 8, and
    # (d) leaves >= 2 parallel grid steps when B >= 2 (both v7x TensorCores get work).
    kmax = max(1, min(row_budget // max(T, 1), (B + 1) // 2))
    k = 0
    for cand in range(min(kmax, B), 0, -1):
        if B % cand == 0 and (cand * Tp) % 8 == 0:
            k = cand
            break
    if k == 0:
        k = B                            # single full-array tile (block == full dims is legal)
    TTp = k * Tp                         # packed rows per tile
    num_tiles = B // k
    assert TTp * PD * 4 <= 16 * 1024 * 1024, (
        "sequence too long for single-axis row tiling; add a T-tiling grid axis "
        "(not needed for max_feats-sized video inputs)")

    # Free, contiguous repack of the input (metadata-only reshape).
    x_packed = x.astype(jnp.float32).reshape(Np, PF)

    # Block-diagonal projection weight: packed out row j, lane block p = x_row[P*j + p] @ w.
    wbd = jnp.zeros((PF, PD), jnp.float32)
    for blk in range(P):
        wbd = wbd.at[blk * F:(blk + 1) * F, blk * D:(blk + 1) * D].set(w.astype(jnp.float32))

    # Fused resident params: rows = packed bias / gamma / beta.
    params = jnp.stack(
        [jnp.tile(b, P), jnp.tile(gamma, P), jnp.tile(beta, P)]).astype(jnp.float32)

    # Packed positional slab covering exactly one tile period (k whole sequences).
    # Constant index_map -> DMA'd once, kept resident (not re-streamed per grid step).
    pe_slab = jnp.tile(pe.astype(jnp.float32), (k, 1)).reshape(TTp, PD)

    # Scoped-VMEM budget: double-buffered x/out streams + resident pe/W/params, 2x margin,
    # capped at 48 MiB to leave headroom under v7x's 64 MiB physical VMEM.
    tile_bytes = TTp * PF * 4 + TTp * PD * 4
    resident_bytes = TTp * PD * 4 + PF * PD * 4 + 3 * PD * 4
    vmem_limit = int(min(max(2 * (2 * tile_bytes + resident_bytes), 8 * 1024 * 1024),
                         48 * 1024 * 1024))

    kernel = functools.partial(video_embedding_kernel, d_model=D)
    out_packed = pl.pallas_call(
        kernel,
        out_shape=jax.ShapeDtypeStruct((Np, PD), jnp.float32),
        grid=(num_tiles,),
        in_specs=[
            pl.BlockSpec((TTp, PF), lambda i: (i, 0)),    # packed x tile (streamed)
            pl.BlockSpec((PF, PD), lambda i: (0, 0)),     # block-diag W (resident)
            pl.BlockSpec((3, PD), lambda i: (0, 0)),      # fused bias/gamma/beta (resident)
            pl.BlockSpec((TTp, PD), lambda i: (0, 0)),    # pe slab (resident, fetched once)
        ],
        out_specs=pl.BlockSpec((TTp, PD), lambda i: (i, 0)),
        compiler_params=pltpu.CompilerParams(
            dimension_semantics=("parallel",),
            vmem_limit_bytes=vmem_limit),
    )(x_packed, wbd, params, pe_slab)

    # Free contiguous unpack back to the module's (B, T, D) layout.
    return out_packed.reshape(B, T, D)


# ----------------------------------------------------------------------------- params / pe
def make_positional_table(max_len, d_model):
    position = jnp.arange(0, max_len, dtype=jnp.float32)[:, None]                 # (L, 1)
    div_term = jnp.exp(jnp.arange(0, d_model, 2, dtype=jnp.float32)
                       * -(math.log(10000.0) / d_model))                          # (D/2,)
    pe = jnp.zeros((max_len, d_model), dtype=jnp.float32)
    pe = pe.at[:, 0::2].set(jnp.sin(position * div_term))
    pe = pe.at[:, 1::2].set(jnp.cos(position * div_term))
    return pe                                                                     # (L, D)


def init_params(key, feature_dim, d_model):
    kw, kb = jax.random.split(key)
    bound = 1.0 / math.sqrt(feature_dim)
    w = jax.random.uniform(kw, (feature_dim, d_model), jnp.float32, -bound, bound)
    b = jax.random.uniform(kb, (d_model,), jnp.float32, -bound, bound)
    gamma = jnp.ones((d_model,), jnp.float32)   # nn.LayerNorm defaults
    beta = jnp.zeros((d_model,), jnp.float32)
    return w, b, gamma, beta


def reference(x, w, b, gamma, beta, pe):
    h = x @ w + b
    h = 0.5 * h * (1.0 + jax.lax.erf(h / math.sqrt(2.0)))
    mu = h.mean(-1, keepdims=True)
    var = ((h - mu) ** 2).mean(-1, keepdims=True)
    h = (h - mu) / jnp.sqrt(var + 1e-12) * gamma + beta
    return h + pe[None, :, :]


# ----------------------------------------------------------------------------- main
if __name__ == "__main__":
    # cfgs: feature_dim=16, d_model=32, max_feats=8, dropout=0.1 (eval -> identity)
    B, T, FEAT, DMODEL, MAX_FEATS = 2, 8, 16, 32, 8

    key = jax.random.PRNGKey(0)
    kx, kp = jax.random.split(key)

    x = jax.random.normal(kx, (B, T, FEAT), dtype=jnp.float32)
    w, b, gamma, beta = init_params(kp, FEAT, DMODEL)
    # Round matmul operands to bf16-representable f32 so the comparison is insensitive to
    # the backend's f32-matmul pass policy (single-bf16-pass vs multi-pass); kernel math
    # itself stays fully f32.
    x = x.astype(jnp.bfloat16).astype(jnp.float32)
    w = w.astype(jnp.bfloat16).astype(jnp.float32)
    pe_table = make_positional_table(MAX_FEATS, DMODEL)[:T]   # pe[:, :x.size(1)]

    out = jax.block_until_ready(video_embedding(x, w, b, gamma, beta, pe_table))
    ref = reference(x, w, b, gamma, beta, pe_table)
    assert out.shape == (B, T, DMODEL)
    assert jnp.allclose(out, ref, atol=1e-4, rtol=1e-4), float(jnp.max(jnp.abs(out - ref)))

    # Larger shape: exercises k > 1 (multi-sequence tiles), a 2-step parallel grid,
    # and the tiled-pe-slab path.
    B2, T2 = 4, 256
    x2 = jax.random.normal(jax.random.PRNGKey(1), (B2, T2, FEAT), dtype=jnp.float32)
    x2 = x2.astype(jnp.bfloat16).astype(jnp.float32)
    pe2 = make_positional_table(T2, DMODEL)
    out2 = jax.block_until_ready(video_embedding(x2, w, b, gamma, beta, pe2))
    ref2 = reference(x2, w, b, gamma, beta, pe2)
    assert out2.shape == (B2, T2, DMODEL)
    assert jnp.allclose(out2, ref2, atol=1e-4, rtol=1e-4), float(jnp.max(jnp.abs(out2 - ref2)))

    print("KERNEL_OK")
</pallas_src>

<mosaic_0001>
module attributes {stable_mosaic.version = 11 : i64} {
  func.func @video_embedding_kernel(%arg0: i32, %arg1: memref<4x64xf32, #tpu.memory_space<vmem>>, %arg2: memref<64x128xf32, #tpu.memory_space<vmem>>, %arg3: memref<3x128xf32, #tpu.memory_space<vmem>>, %arg4: memref<4x128xf32, #tpu.memory_space<vmem>>, %arg5: memref<4x128xf32, #tpu.memory_space<vmem>>) attributes {dimension_semantics = [#tpu.dimension_semantics<parallel>], iteration_bounds = array<i64: 1>, scalar_prefetch = 0 : i64, scratch_operands = 0 : i64, tpu.core_type = #tpu.core_type<tc>, window_params = [{transform_indices = @transform_0, window_bounds = array<i64: 4, 64>}, {pipeline_mode = #tpu.pipeline_mode<synchronous>, transform_indices = @transform_1, window_bounds = array<i64: 64, 128>}, {pipeline_mode = #tpu.pipeline_mode<synchronous>, transform_indices = @transform_2, window_bounds = array<i64: 3, 128>}, {pipeline_mode = #tpu.pipeline_mode<synchronous>, transform_indices = @transform_3, window_bounds = array<i64: 4, 128>}, {transform_indices = @transform_4, window_bounds = array<i64: 4, 128>}]} {
    %c0 = arith.constant 0 : index
    %c0_0 = arith.constant 0 : index
    %0 = vector.load %arg1[%c0, %c0_0] : memref<4x64xf32, #tpu.memory_space<vmem>>, vector<4x64xf32>
    %c0_1 = arith.constant 0 : index
    %c0_2 = arith.constant 0 : index
    %1 = vector.load %arg2[%c0_1, %c0_2] : memref<64x128xf32, #tpu.memory_space<vmem>>, vector<64x128xf32>
    %cst = arith.constant dense<0.000000e+00> : vector<4x128xf32>
    %2 = tpu.matmul %0, %1, %cst {dimension_numbers = #tpu.dot_dimension_numbers<[1], [0], [0], [1], [0, 0, 1, 1], [], []>} : vector<4x64xf32>, vector<64x128xf32>, vector<4x128xf32> -> vector<4x128xf32>
    %c0_3 = arith.constant 0 : index
    %c0_4 = arith.constant 0 : index
    %3 = vector.load %arg3[%c0_3, %c0_4] : memref<3x128xf32, #tpu.memory_space<vmem>>, vector<3x128xf32>
    %4 = vector.extract_strided_slice %3 {offsets = [0, 0], sizes = [1, 128], strides = [1, 1]} : vector<3x128xf32> to vector<1x128xf32>
    %5 = vector.broadcast %4 : vector<1x128xf32> to vector<4x128xf32>
    %6 = arith.addf %2, %5 : vector<4x128xf32>
    %cst_5 = arith.constant 5.000000e-01 : f32
    %7 = vector.broadcast %cst_5 : f32 to vector<4x128xf32>
    %8 = arith.mulf %7, %6 : vector<4x128xf32>
    %cst_6 = arith.constant 0.707106769 : f32
    %9 = vector.broadcast %cst_6 : f32 to vector<4x128xf32>
    %10 = arith.mulf %6, %9 : vector<4x128xf32>
    %11 = math.erf %10 : vector<4x128xf32>
    %cst_7 = arith.constant 1.000000e+00 : f32
    %12 = vector.broadcast %cst_7 : f32 to vector<4x128xf32>
    %13 = arith.addf %12, %11 : vector<4x128xf32>
    %14 = arith.mulf %8, %13 : vector<4x128xf32>
    %15 = tpu.iota {dimensions = array<i32: 1>} : vector<1x128xi32>
    %c0_i32 = arith.constant 0 : i32
    %16 = vector.broadcast %c0_i32 : i32 to vector<1x128xi32>
    %17 = arith.cmpi sge, %15, %16 : vector<1x128xi32>
    %c32_i32 = arith.constant 32 : i32
    %18 = vector.broadcast %c32_i32 : i32 to vector<1x128xi32>
    %19 = arith.cmpi slt, %15, %18 : vector<1x128xi32>
    %20 = arith.andi %17, %19 : vector<1x128xi1>
    %cst_8 = arith.constant 1.000000e+00 : f32
    %cst_9 = arith.constant 0.000000e+00 : f32
    %21 = vector.broadcast %cst_8 : f32 to vector<1x128xf32>
    %22 = vector.broadcast %cst_9 : f32 to vector<1x128xf32>
    %23 = arith.select %20, %21, %22 : vector<1x128xi1>, vector<1x128xf32>
    %c32_i32_10 = arith.constant 32 : i32
    %24 = vector.broadcast %c32_i32_10 : i32 to vector<1x128xi32>
    %25 = arith.cmpi sge, %15, %24 : vector<1x128xi32>
    %c64_i32 = arith.constant 64 : i32
    %26 = vector.broadcast %c64_i32 : i32 to vector<1x128xi32>
    %27 = arith.cmpi slt, %15, %26 : vector<1x128xi32>
    %28 = arith.andi %25, %27 : vector<1x128xi1>
    %cst_11 = arith.constant 1.000000e+00 : f32
    %cst_12 = arith.constant 0.000000e+00 : f32
    %29 = vector.broadcast %cst_11 : f32 to vector<1x128xf32>
    %30 = vector.broadcast %cst_12 : f32 to vector<1x128xf32>
    %31 = arith.select %28, %29, %30 : vector<1x128xi1>, vector<1x128xf32>
    %c64_i32_13 = arith.constant 64 : i32
    %32 = vector.broadcast %c64_i32_13 : i32 to vector<1x128xi32>
    %33 = arith.cmpi sge, %15, %32 : vector<1x128xi32>
    %c96_i32 = arith.constant 96 : i32
    %34 = vector.broadcast %c96_i32 : i32 to vector<1x128xi32>
    %35 = arith.cmpi slt, %15, %34 : vector<1x128xi32>
    %36 = arith.andi %33, %35 : vector<1x128xi1>
    %cst_14 = arith.constant 1.000000e+00 : f32
    %cst_15 = arith.constant 0.000000e+00 : f32
    %37 = vector.broadcast %cst_14 : f32 to vector<1x128xf32>
    %38 = vector.broadcast %cst_15 : f32 to vector<1x128xf32>
    %39 = arith.select %36, %37, %38 : vector<1x128xi1>, vector<1x128xf32>
    %c96_i32_16 = arith.constant 96 : i32
    %40 = vector.broadcast %c96_i32_16 : i32 to vector<1x128xi32>
    %41 = arith.cmpi sge, %15, %40 : vector<1x128xi32>
    %c128_i32 = arith.constant 128 : i32
    %42 = vector.broadcast %c128_i32 : i32 to vector<1x128xi32>
    %43 = arith.cmpi slt, %15, %42 : vector<1x128xi32>
    %44 = arith.andi %41, %43 : vector<1x128xi1>
    %cst_17 = arith.constant 1.000000e+00 : f32
    %cst_18 = arith.constant 0.000000e+00 : f32
    %45 = vector.broadcast %cst_17 : f32 to vector<1x128xf32>
    %46 = vector.broadcast %cst_18 : f32 to vector<1x128xf32>
    %47 = arith.select %44, %45, %46 : vector<1x128xi1>, vector<1x128xf32>
    %cst_19 = arith.constant 0.000000e+00 : f32
    %48 = vector.broadcast %cst_19 : f32 to vector<4x128xf32>
    %49 = vector.broadcast %23 : vector<1x128xf32> to vector<4x128xf32>
    %50 = arith.mulf %14, %49 : vector<4x128xf32>
    %cst_20 = arith.constant dense<0.000000e+00> : vector<4xf32>
    %51 = vector.multi_reduction <add>, %50, %cst_20 [1] : vector<4x128xf32> to vector<4xf32>
    %52 = vector.shape_cast %51 : vector<4xf32> to vector<4x1xf32>
    %cst_21 = arith.constant 3.125000e-02 : f32
    %53 = vector.broadcast %cst_21 : f32 to vector<4x1xf32>
    %54 = arith.mulf %52, %53 : vector<4x1xf32>
    %55 = vector.broadcast %23 : vector<1x128xf32> to vector<4x128xf32>
    %56 = vector.broadcast %54 : vector<4x1xf32> to vector<4x128xf32>
    %57 = arith.mulf %55, %56 : vector<4x128xf32>
    %58 = arith.addf %48, %57 : vector<4x128xf32>
    %59 = vector.broadcast %31 : vector<1x128xf32> to vector<4x128xf32>
    %60 = arith.mulf %14, %59 : vector<4x128xf32>
    %cst_22 = arith.constant dense<0.000000e+00> : vector<4xf32>
    %61 = vector.multi_reduction <add>, %60, %cst_22 [1] : vector<4x128xf32> to vector<4xf32>
    %62 = vector.shape_cast %61 : vector<4xf32> to vector<4x1xf32>
    %cst_23 = arith.constant 3.125000e-02 : f32
    %63 = vector.broadcast %cst_23 : f32 to vector<4x1xf32>
    %64 = arith.mulf %62, %63 : vector<4x1xf32>
    %65 = vector.broadcast %31 : vector<1x128xf32> to vector<4x128xf32>
    %66 = vector.broadcast %64 : vector<4x1xf32> to vector<4x128xf32>
    %67 = arith.mulf %65, %66 : vector<4x128xf32>
    %68 = arith.addf %58, %67 : vector<4x128xf32>
    %69 = vector.broadcast %39 : vector<1x128xf32> to vector<4x128xf32>
    %70 = arith.mulf %14, %69 : vector<4x128xf32>
    %cst_24 = arith.constant dense<0.000000e+00> : vector<4xf32>
    %71 = vector.multi_reduction <add>, %70, %cst_24 [1] : vector<4x128xf32> to vector<4xf32>
    %72 = vector.shape_cast %71 : vector<4xf32> to vector<4x1xf32>
    %cst_25 = arith.constant 3.125000e-02 : f32
    %73 = vector.broadcast %cst_25 : f32 to vector<4x1xf32>
    %74 = arith.mulf %72, %73 : vector<4x1xf32>
    %75 = vector.broadcast %39 : vector<1x128xf32> to vector<4x128xf32>
    %76 = vector.broadcast %74 : vector<4x1xf32> to vector<4x128xf32>
    %77 = arith.mulf %75, %76 : vector<4x128xf32>
    %78 = arith.addf %68, %77 : vector<4x128xf32>
    %79 = vector.broadcast %47 : vector<1x128xf32> to vector<4x128xf32>
    %80 = arith.mulf %14, %79 : vector<4x128xf32>
    %cst_26 = arith.constant dense<0.000000e+00> : vector<4xf32>
    %81 = vector.multi_reduction <add>, %80, %cst_26 [1] : vector<4x128xf32> to vector<4xf32>
    %82 = vector.shape_cast %81 : vector<4xf32> to vector<4x1xf32>
    %cst_27 = arith.constant 3.125000e-02 : f32
    %83 = vector.broadcast %cst_27 : f32 to vector<4x1xf32>
    %84 = arith.mulf %82, %83 : vector<4x1xf32>
    %85 = vector.broadcast %47 : vector<1x128xf32> to vector<4x128xf32>
    %86 = vector.broadcast %84 : vector<4x1xf32> to vector<4x128xf32>
    %87 = arith.mulf %85, %86 : vector<4x128xf32>
    %88 = arith.addf %78, %87 : vector<4x128xf32>
    %89 = arith.subf %14, %88 : vector<4x128xf32>
    %90 = arith.mulf %89, %89 : vector<4x128xf32>
    %cst_28 = arith.constant 0.000000e+00 : f32
    %91 = vector.broadcast %cst_28 : f32 to vector<4x128xf32>
    %92 = vector.broadcast %23 : vector<1x128xf32> to vector<4x128xf32>
    %93 = arith.mulf %90, %92 : vector<4x128xf32>
    %cst_29 = arith.constant dense<0.000000e+00> : vector<4xf32>
    %94 = vector.multi_reduction <add>, %93, %cst_29 [1] : vector<4x128xf32> to vector<4xf32>
    %95 = vector.shape_cast %94 : vector<4xf32> to vector<4x1xf32>
    %cst_30 = arith.constant 3.125000e-02 : f32
    %96 = vector.broadcast %cst_30 : f32 to vector<4x1xf32>
    %97 = arith.mulf %95, %96 : vector<4x1xf32>
    %98 = vector.broadcast %23 : vector<1x128xf32> to vector<4x128xf32>
    %99 = vector.broadcast %97 : vector<4x1xf32> to vector<4x128xf32>
    %100 = arith.mulf %98, %99 : vector<4x128xf32>
    %101 = arith.addf %91, %100 : vector<4x128xf32>
    %102 = vector.broadcast %31 : vector<1x128xf32> to vector<4x128xf32>
    %103 = arith.mulf %90, %102 : vector<4x128xf32>
    %cst_31 = arith.constant dense<0.000000e+00> : vector<4xf32>
    %104 = vector.multi_reduction <add>, %103, %cst_31 [1] : vector<4x128xf32> to vector<4xf32>
    %105 = vector.shape_cast %104 : vector<4xf32> to vector<4x1xf32>
    %cst_32 = arith.constant 3.125000e-02 : f32
    %106 = vector.broadcast %cst_32 : f32 to vector<4x1xf32>
    %107 = arith.mulf %105, %106 : vector<4x1xf32>
    %108 = vector.broadcast %31 : vector<1x128xf32> to vector<4x128xf32>
    %109 = vector.broadcast %107 : vector<4x1xf32> to vector<4x128xf32>
    %110 = arith.mulf %108, %109 : vector<4x128xf32>
    %111 = arith.addf %101, %110 : vector<4x128xf32>
    %112 = vector.broadcast %39 : vector<1x128xf32> to vector<4x128xf32>
    %113 = arith.mulf %90, %112 : vector<4x128xf32>
    %cst_33 = arith.constant dense<0.000000e+00> : vector<4xf32>
    %114 = vector.multi_reduction <add>, %113, %cst_33 [1] : vector<4x128xf32> to vector<4xf32>
    %115 = vector.shape_cast %114 : vector<4xf32> to vector<4x1xf32>
    %cst_34 = arith.constant 3.125000e-02 : f32
    %116 = vector.broadcast %cst_34 : f32 to vector<4x1xf32>
    %117 = arith.mulf %115, %116 : vector<4x1xf32>
    %118 = vector.broadcast %39 : vector<1x128xf32> to vector<4x128xf32>
    %119 = vector.broadcast %117 : vector<4x1xf32> to vector<4x128xf32>
    %120 = arith.mulf %118, %119 : vector<4x128xf32>
    %121 = arith.addf %111, %120 : vector<4x128xf32>
    %122 = vector.broadcast %47 : vector<1x128xf32> to vector<4x128xf32>
    %123 = arith.mulf %90, %122 : vector<4x128xf32>
    %cst_35 = arith.constant dense<0.000000e+00> : vector<4xf32>
    %124 = vector.multi_reduction <add>, %123, %cst_35 [1] : vector<4x128xf32> to vector<4xf32>
    %125 = vector.shape_cast %124 : vector<4xf32> to vector<4x1xf32>
    %cst_36 = arith.constant 3.125000e-02 : f32
    %126 = vector.broadcast %cst_36 : f32 to vector<4x1xf32>
    %127 = arith.mulf %125, %126 : vector<4x1xf32>
    %128 = vector.broadcast %47 : vector<1x128xf32> to vector<4x128xf32>
    %129 = vector.broadcast %127 : vector<4x1xf32> to vector<4x128xf32>
    %130 = arith.mulf %128, %129 : vector<4x128xf32>
    %131 = arith.addf %121, %130 : vector<4x128xf32>
    %cst_37 = arith.constant 9.99999996E-13 : f32
    %132 = vector.broadcast %cst_37 : f32 to vector<4x128xf32>
    %133 = arith.addf %131, %132 : vector<4x128xf32>
    %134 = math.rsqrt %133 : vector<4x128xf32>
    %135 = arith.mulf %89, %134 : vector<4x128xf32>
    %136 = vector.extract_strided_slice %3 {offsets = [1, 0], sizes = [1, 128], strides = [1, 1]} : vector<3x128xf32> to vector<1x128xf32>
    %137 = vector.broadcast %136 : vector<1x128xf32> to vector<4x128xf32>
    %138 = arith.mulf %135, %137 : vector<4x128xf32>
    %139 = vector.extract_strided_slice %3 {offsets = [2, 0], sizes = [1, 128], strides = [1, 1]} : vector<3x128xf32> to vector<1x128xf32>
    %140 = vector.broadcast %139 : vector<1x128xf32> to vector<4x128xf32>
    %141 = arith.addf %138, %140 : vector<4x128xf32>
    %c0_38 = arith.constant 0 : index
    %c0_39 = arith.constant 0 : index
    %142 = vector.load %arg4[%c0_38, %c0_39] : memref<4x128xf32, #tpu.memory_space<vmem>>, vector<4x128xf32>
    %143 = arith.addf %141, %142 : vector<4x128xf32>
    %c0_40 = arith.constant 0 : index
    %c0_41 = arith.constant 0 : index
    %144 = vector.load %arg5[%c0_40, %c0_41] : memref<4x128xf32, #tpu.memory_space<vmem>>, vector<4x128xf32>
    tpu.vector_store %arg5[%c0_40, %c0_41], %143 {strides = array<i32>} : memref<4x128xf32, #tpu.memory_space<vmem>>, vector<4x128xf32>,
    return
  }
  func.func @transform_0(%arg0: i32) -> (i32, i32) {
    %c0_i32 = arith.constant 0 : i32
    %c0_i32_0 = arith.constant 0 : i32
    return %arg0, %c0_i32 : i32, i32
  }
  func.func @transform_1(%arg0: i32) -> (i32, i32) {
    %c0_i32 = arith.constant 0 : i32
    %c0_i32_0 = arith.constant 0 : i32
    %c0_i32_1 = arith.constant 0 : i32
    return %c0_i32, %c0_i32_0 : i32, i32
  }
  func.func @transform_2(%arg0: i32) -> (i32, i32) {
    %c0_i32 = arith.constant 0 : i32
    %c0_i32_0 = arith.constant 0 : i32
    %c0_i32_1 = arith.constant 0 : i32
    return %c0_i32, %c0_i32_0 : i32, i32
  }
  func.func @transform_3(%arg0: i32) -> (i32, i32) {
    %c0_i32 = arith.constant 0 : i32
    %c0_i32_0 = arith.constant 0 : i32
    %c0_i32_1 = arith.constant 0 : i32
    return %c0_i32, %c0_i32_0 : i32, i32
  }
  func.func @transform_4(%arg0: i32) -> (i32, i32) {
    %c0_i32 = arith.constant 0 : i32
    %c0_i32_0 = arith.constant 0 : i32
    return %arg0, %c0_i32 : i32, i32
  }
}

</mosaic_0001>

<llo_original>
// kernel: tpu_custom_call.1
$region0: #{tpu_custom_call.1}
  #allocation0 [shape = 'u32[]', space=smem, size = 0x4, offset = 0x4, fixed_abs, tag = 'smem constant byte address 0x4 - core index']
  #allocation1 [shape = 'u32[144,128]{1,0:T(1,128)}', space=vmem, size = 0x12000, scoped, tag = 'internal scratch']
  %s0 = inlined_call_operand.hbm [shape: f32[4,64], index: 0, kind: input, shape index: {}]
  %s1 = inlined_call_operand.hbm [shape: f32[64,128], index: 1, kind: input, shape index: {}]
  %s2 = inlined_call_operand.vmem [shape: f32[3,128], index: 2, kind: input, shape index: {}]
  %s3 = inlined_call_operand.vmem [shape: f32[4,128], index: 3, kind: input, shape index: {}]
  %s4 = inlined_call_operand.hbm [shape: f32[4,128], index: 4, kind: output, shape index: {}]
  %s5 = sld [smem:[#allocation0]]
  $region34: #{tpu_custom_call.1} parent=0
    _
  %s7 = ssub.s32 1, %s5
  %s8 = scalar_select 0, %s7, %s5
  $region1: #{tpu_custom_call.1} parent=0
    #allocation2 [shape = 'u8[2048]{0}', space=vmem, size = 0x800, scoped, tag = 'input window, operand 0, single buffered']
    #allocation3 [shape = 's32[1]{0}', space=sflag, size = 0x4, scoped, tag = 'scoped memory for tpu_custom_call.1']
    #allocation4 [shape = 's32[1]{0}', space=sflag, size = 0x4, scoped, tag = 'scoped memory for tpu_custom_call.1']
    #allocation5 [shape = 'u8[32768]{0}', space=vmem, size = 0x8000, scoped, tag = 'input window, operand 1, single buffered']
    #allocation6 [shape = 's32[1]{0}', space=sflag, size = 0x4, scoped, tag = 'scoped memory for tpu_custom_call.1']
    #allocation7 [shape = 'u8[2048]{0}', space=vmem, size = 0x800, scoped, tag = 'output window, operand 0, single buffered']
    %9 = vsyncpa [#allocation3], 0
    %10 = vsyncpa [#allocation6], 0
    %11 = vsyncpa [#allocation4], 0
    // Predicated region
    $region2: #{tpu_custom_call.1} parent=1 // pred_check
      _
    $region3: #{tpu_custom_call.1} parent=1 // pred_check_branch
      %13 = sbr.rel (0) target = $region5
    $region4: #{tpu_custom_call.1} parent=1 // pred_region
      %s15 = ssub.s32 64, 64
      %16 = vsyncadd [#allocation3], %s15
      %s18 = sshll.u32 [#allocation2], 4
      %s19 = int_to_ptr.vmem [resolvable:$true] %s18
      %21 = dma.hbm_to_vmem [thread:$0]  %s0, 64, %s19, [#allocation3]
    $region5: #{tpu_custom_call.1} parent=1 // pred_fallthru
      _
    // Predicated region
    $region6: #{tpu_custom_call.1} parent=1 // pred_check
      _
    $region7: #{tpu_custom_call.1} parent=1 // pred_check_branch
      %23 = sbr.rel (0) target = $region9
    $region8: #{tpu_custom_call.1} parent=1 // pred_region
      %s25 = ssub.s32 1024, 1024
      %26 = vsyncadd [#allocation6], %s25
      %s27 = sshll.u32 [#allocation5], 4
      %s28 = int_to_ptr.vmem [resolvable:$true] %s27
      %33 = dma.hbm_to_vmem [thread:$0]  %s1, 1024, %s28, [#allocation6], 128, 128, 8
    $region9: #{tpu_custom_call.1} parent=1 // pred_fallthru
      _
    // Predicated region
    $region10: #{tpu_custom_call.1} parent=1 // pred_check
      _
    $region11: #{tpu_custom_call.1} parent=1 // pred_check_branch
      %35 = sbr.rel (0) target = $region13
    $region12: #{tpu_custom_call.1} parent=1 // pred_region
      _
    $region13: #{tpu_custom_call.1} parent=1 // pred_fallthru
      _
    // Predicated region
    $region14: #{tpu_custom_call.1} parent=1 // pred_check
      _
    $region15: #{tpu_custom_call.1} parent=1 // pred_check_branch
      %37 = sbr.rel (0) target = $region17
    $region16: #{tpu_custom_call.1} parent=1 // pred_region
      _
    $region17: #{tpu_custom_call.1} parent=1 // pred_fallthru
      _
    // Predicated region
    $region18: #{tpu_custom_call.1} parent=1 // pred_check
      _
    $region19: #{tpu_custom_call.1} parent=1 // pred_check_branch
      %39 = sbr.rel (0) target = $region21
    $region20: #{tpu_custom_call.1} parent=1 // pred_region
      %40 = dma.done [#allocation3], 64
    $region21: #{tpu_custom_call.1} parent=1 // pred_fallthru
      _
    // Predicated region
    $region22: #{tpu_custom_call.1} parent=1 // pred_check
      _
    $region23: #{tpu_custom_call.1} parent=1 // pred_check_branch
      %42 = sbr.rel (0) target = $region25
    $region24: #{tpu_custom_call.1} parent=1 // pred_region
      %43 = dma.done [#allocation6], 1024
    $region25: #{tpu_custom_call.1} parent=1 // pred_fallthru
      _
    %v44 = vld [vmem:[#allocation2] sm:$0xf]
    %v45 = vld [vmem:[#allocation5] sm:$0xff]
    %v46 = vld [vmem:[#allocation5 + $0x8] sm:$0xff]
    %v47 = vld [vmem:[#allocation5 + $0x10] sm:$0xff]
    %v48 = vld [vmem:[#allocation5 + $0x18] sm:$0xff]
    %v49 = vld [vmem:[#allocation5 + $0x20] sm:$0xff]
    %v50 = vld [vmem:[#allocation5 + $0x28] sm:$0xff]
    %v51 = vld [vmem:[#allocation5 + $0x30] sm:$0xff]
    %v52 = vld [vmem:[#allocation5 + $0x38] sm:$0xff]
    %v53 = vld [vmem:[%s2] sm:$0x7]
    %v54 = vlaneseq
    %v55 = vshrl.u32 %v54, 7
    %v56 = vsub.s32 0, %v55
    %v57 = vrot.slane %v53, %v56
    %vm58 = vcmask 523264
    %v60 = vsel %vm58, %v44, 0
    %62 = vmatprep.subr.mxu0 0.0
    %63 = vmatpush1.msra.mxu0 %v45
    %64 = vmatprep.subr.mxu0 0.0
    %65 = vmatpush1.msra.mxu0 %v46
    %66 = vmatprep.subr.mxu0 0.0
    %67 = vmatpush1.msra.mxu0 %v47
    %68 = vmatprep.subr.mxu0 0.0
    %69 = vmatpush1.msra.mxu0 %v48
    %70 = vmatprep.subr.mxu0 0.0
    %71 = vmatpush1.msra.mxu0 %v49
    %72 = vmatprep.subr.mxu0 0.0
    %73 = vmatpush1.msra.mxu0 %v50
    %74 = vmatprep.subr.mxu0 0.0
    %75 = vmatpush1.msra.mxu0 %v51
    %76 = vmatprep.subr.mxu0 0.0
    %77 = vmatpush1.msra.mxu0 %v52
    %78 = vmatprep.subr.mxu0 0.0
    %79 = vmatpush1.msra.mxu0 0.0
    %80 = vmatprep.subr.mxu0 0.0
    %81 = vmatpush1.msra.mxu0 0.0
    %82 = vmatprep.subr.mxu0 0.0
    %83 = vmatpush1.msra.mxu0 0.0
    %84 = vmatprep.subr.mxu0 0.0
    %85 = vmatpush1.msra.mxu0 0.0
    %86 = vmatprep.subr.mxu0 0.0
    %87 = vmatpush1.msra.mxu0 0.0
    %88 = vmatprep.subr.mxu0 0.0
    %89 = vmatpush1.msra.mxu0 0.0
    %90 = vmatprep.subr.mxu0 0.0
    %91 = vmatpush1.msra.mxu0 0.0
    %92 = vmatprep.subr.mxu0 0.0
    %93 = vmatpush1.msra.mxu0 0.0
    %94 = vmatprep.subr.mxu0 0.0
    %95 = vmatpush1.msra.mxu0 0.0
    %96 = vmatprep.subr.mxu0 0.0
    %97 = vmatpush1.msra.mxu0 0.0
    %98 = vmatprep.subr.mxu0 0.0
    %99 = vmatpush1.msra.mxu0 0.0
    %100 = vmatprep.subr.mxu0 0.0
    %101 = vmatpush1.msra.mxu0 0.0
    %102 = vmatprep.subr.mxu0 0.0
    %103 = vmatpush1.msra.mxu0 0.0
    %104 = vmatprep.subr.mxu0 0.0
    %105 = vmatpush1.msra.mxu0 0.0
    %106 = vmatprep.subr.mxu0 0.0
    %107 = vmatpush1.msra.mxu0 0.0
    %108 = vmatprep.subr.mxu0 0.0
    %109 = vmatpush1.msra.mxu0 0.0
    %110 = vmatprep.subr.mxu0 0.0
    %111 = vmatpush1.msra.mxu0 0.0
    %112 = vmatprep.subr.mxu0 0.0
    %113 = vmatpush1.msra.mxu0 0.0
    %114 = vmatprep.subr.mxu0 0.0
    %115 = vmatpush1.msra.mxu0 0.0
    %116 = vmatprep.subr.mxu0 0.0
    %117 = vmatpush1.msra.mxu0 0.0
    %118 = vmatprep.subr.mxu0 0.0
    %119 = vmatpush1.msra.mxu0 0.0
    %120 = vmatprep.subr.mxu0 0.0
    %121 = vmatpush1.msra.mxu0 0.0
    %122 = vmatprep.subr.mxu0 0.0
    %123 = vmatpush1.msra.mxu0 0.0
    %124 = vmatprep.subr.mxu0 0.0
    %125 = vmatpush1.msra.mxu0 0.0
    %126 = vmatprep.mubr.f32.mxu0 0.0
    %127 = vmatmul.mubr.f32.gmra.mrb[0].mxu0 %v60
    %v128 = vpop.f32.mrb[0].mxu0
    %v129 = vadd.f32 %v57, %v128
    %v130 = vpop.f32.mrb[0].mxu0
    %131 = vdwg.mxu0
    %v132 = vmul.f32 %v129, 0.5
    %v133 = vmul.f32 %v129, 0.70710677
    %v134 = verf.f32.pop %v133
    %v135 = vadd.f32 %v134, 1.0
    %v136 = vmul.f32 %v132, %v135
    %v137 = vlaneseq
    %v138 = vand.u32 %v137, 127
    %vm139 = vcmp.ge.s32.totalorder %v138, 0
    %vm140 = vcmp.lt.s32.totalorder %v138, 32
    %vm141 = vmand %vm139, %vm140
    %v142 = vsel %vm141, 1.0, 0.0
    %vm143 = vcmp.ge.s32.totalorder %v138, 32
    %vm144 = vcmp.lt.s32.totalorder %v138, 64
    %vm145 = vmand %vm143, %vm144
    %v146 = vsel %vm145, 1.0, 0.0
    %vm147 = vcmp.ge.s32.totalorder %v138, 64
    %vm148 = vcmp.lt.s32.totalorder %v138, 96
    %vm149 = vmand %vm147, %vm148
    %v150 = vsel %vm149, 1.0, 0.0
    %vm151 = vcmp.ge.s32.totalorder %v138, 96
    %vm152 = vcmp.lt.s32.totalorder %v138, 128
    %vm153 = vmand %vm151, %vm152
    %v154 = vsel %vm153, 1.0, 0.0
    %v155 = vmul.f32 %v136, %v142
    %vm156 = vcmask 1043456
    %v157 = vsel %vm156, %v155, 0.0
    %158 = vadd.xlane.f32.xlu0 %v157
    %v159 = vpop.xlane.xlu0 %158
    %v160 = vmul.f32 %v159, 0.03125
    %v161 = vmul.f32 %v142, %v160
    %v162 = vadd.f32 %v161, 0.0
    %v163 = vmul.f32 %v136, %v146
    %v164 = vsel %vm156, %v163, 0.0
    %165 = vadd.xlane.f32.xlu0 %v164
    %v166 = vpop.xlane.xlu0 %165
    %v167 = vmul.f32 %v166, 0.03125
    %v168 = vmul.f32 %v146, %v167
    %v169 = vadd.f32 %v162, %v168
    %v170 = vmul.f32 %v136, %v150
    %v171 = vsel %vm156, %v170, 0.0
    %172 = vadd.xlane.f32.xlu0 %v171
    %v173 = vpop.xlane.xlu0 %172
    %v174 = vmul.f32 %v173, 0.03125
    %v175 = vmul.f32 %v150, %v174
    %v176 = vadd.f32 %v169, %v175
    %v177 = vmul.f32 %v136, %v154
    %v178 = vsel %vm156, %v177, 0.0
    %179 = vadd.xlane.f32.xlu0 %v178
    %v180 = vpop.xlane.xlu0 %179
    %v181 = vmul.f32 %v180, 0.03125
    %v182 = vmul.f32 %v154, %v181
    %v183 = vadd.f32 %v176, %v182
    %v184 = vsub.f32 %v136, %v183
    %v185 = vmul.f32 %v184, %v184
    %v186 = vmul.f32 %v185, %v142
    %v187 = vsel %vm156, %v186, 0.0
    %188 = vadd.xlane.f32.xlu0 %v187
    %v189 = vpop.xlane.xlu0 %188
    %v190 = vmul.f32 %v189, 0.03125
    %v191 = vmul.f32 %v142, %v190
    %v192 = vadd.f32 %v191, 0.0
    %v193 = vmul.f32 %v185, %v146
    %v194 = vsel %vm156, %v193, 0.0
    %195 = vadd.xlane.f32.xlu0 %v194
    %v196 = vpop.xlane.xlu0 %195
    %v197 = vmul.f32 %v196, 0.03125
    %v198 = vmul.f32 %v146, %v197
    %v199 = vadd.f32 %v192, %v198
    %v200 = vmul.f32 %v185, %v150
    %v201 = vsel %vm156, %v200, 0.0
    %202 = vadd.xlane.f32.xlu0 %v201
    %v203 = vpop.xlane.xlu0 %202
    %v204 = vmul.f32 %v203, 0.03125
    %v205 = vmul.f32 %v150, %v204
    %v206 = vadd.f32 %v199, %v205
    %v207 = vmul.f32 %v185, %v154
    %v208 = vsel %vm156, %v207, 0.0
    %209 = vadd.xlane.f32.xlu0 %v208
    %v210 = vpop.xlane.xlu0 %209
    %v211 = vmul.f32 %v210, 0.03125
    %v212 = vmul.f32 %v154, %v211
    %v213 = vadd.f32 %v206, %v212
    %v214 = vadd.f32 %v213, 1e-12
    %v215 = vrsqrt.pop %v214
    %v216 = vmul.f32 %v184, %v215
    %v217 = vlaneseq
    %v218 = vshrl.u32 %v217, 7
    %v219 = vsub.s32 1, %v218
    %v220 = vrot.slane %v53, %v219
    %v221 = vmul.f32 %v216, %v220
    %v222 = vlaneseq
    %v223 = vshrl.u32 %v222, 7
    %v224 = vsub.s32 2, %v223
    %v225 = vrot.slane %v53, %v224
    %v226 = vadd.f32 %v221, %v225
    %v227 = vld [vmem:[%s3] sm:$0xf]
    %v228 = vadd.f32 %v226, %v227
    %229 = vst [vmem:[#allocation7] sm:$0xf] %v228
    // Predicated region
    $region26: #{tpu_custom_call.1} parent=1 // pred_check
      _
    $region27: #{tpu_custom_call.1} parent=1 // pred_check_branch
      %231 = sbr.rel (0) target = $region29
    $region28: #{tpu_custom_call.1} parent=1 // pred_region
      %s233 = ssub.s32 64, 64
      %234 = vsyncadd [#allocation4], %s233
      %s236 = sshll.u32 [#allocation7], 4
      %s237 = int_to_ptr.vmem [resolvable:$true] %s236
      %239 = dma.vmem_to_hbm [thread:$0]  %s237, 64, %s4, [#allocation4]
    $region29: #{tpu_custom_call.1} parent=1 // pred_fallthru
      _
    // Predicated region
    $region30: #{tpu_custom_call.1} parent=1 // pred_check
      _
    $region31: #{tpu_custom_call.1} parent=1 // pred_check_branch
      %241 = sbr.rel (0) target = $region33
    $region32: #{tpu_custom_call.1} parent=1 // pred_region
      %242 = dma.done [#allocation4], 64
    $region33: #{tpu_custom_call.1} parent=1 // pred_fallthru
      _
    %243 = vsyncpa [#allocation3], 1
    %244 = vsyncpa [#allocation6], 1
    %245 = vsyncpa [#allocation4], 1

</llo_original>
